<compile_context>
chip_gen: v5e
topology: v5e:2x2
jax: 0.10.0
libtpu: 0.0.40
codegen_flags: <defaults>
</compile_context>

<pallas_src>
import jax
import jax.numpy as jnp
import numpy as np
from jax.experimental import pallas as pl
from jax.experimental.pallas import tpu as pltpu

_K_RAW = 4   # grid channels: (x, y, 1-x, 1-y)
_K_PAD = 8   # contracting dim zero-padded to a full sublane


def build_grid_chw(resolution):
    """Same values as the PyTorch build_grid, flattened to (4, H*W) (CHW order)."""
    ranges = [np.linspace(0.0, 1.0, num=res) for res in resolution]
    g = np.meshgrid(*ranges, sparse=False, indexing="ij")
    g = np.stack(g, axis=-1)                                   # (H, W, 2)
    g = np.reshape(g, [resolution[0], resolution[1], -1]).astype(np.float32)
    g = np.concatenate([g, 1.0 - g], axis=-1)                  # (H, W, 4)
    g = np.transpose(g, (2, 0, 1))                             # (4, H, W) == grid[0] in NCHW
    return jnp.asarray(g.reshape(4, resolution[0] * resolution[1]))


def _soft_pos_embed_kernel(x_ref, grid_ref, w_ref, b_ref, o_ref):
    # x_ref    : (TB, C, HW)  batch tile; channels on sublanes, HW on lanes
    # grid_ref : (Kp, HW)     fixed positional grid (rows 4..Kp-1 are zero)
    # w_ref    : (C, Kp)      1x1-conv weight (cols 4..Kp-1 are zero)
    # b_ref    : (C, 1)       1x1-conv bias
    # Fused 1x1 conv over the fixed grid; MXU work hides under the add.
    emb = jnp.dot(w_ref[...], grid_ref[...],
                  preferred_element_type=jnp.float32) + b_ref[...]   # (C, HW)
    o_ref[...] = x_ref[...] + emb                                    # broadcast over batch tile


@jax.jit
def soft_position_embed(x_nchw, grid_chw, weight, bias):
    """x_nchw: (B, C, H, W) f32, weight: (C, 4), bias: (C,) -> (B, C, H, W) f32."""
    B, C, H, W = x_nchw.shape
    HW = H * W

    # Zero-pad the contracting dim 4 -> 8 (mathematically a no-op).
    w_pad = jnp.zeros((C, _K_PAD), jnp.float32).at[:, :_K_RAW].set(weight)
    g_pad = jnp.zeros((_K_PAD, HW), jnp.float32).at[:_K_RAW, :].set(grid_chw)
    b_col = bias.reshape(C, 1).astype(jnp.float32)

    # Free reshape: stays NCHW, lane dim becomes HW (multiple of 128 at 16x16).
    x = x_nchw.reshape(B, C, HW)

    # Pack as many batch elements per block as fit a ~2 MiB x-block: at the
    # shipped shape that's the whole batch -> a single grid step.
    per_batch_bytes = C * HW * 4
    target_bytes = 2 * 1024 * 1024
    tb = B
    if per_batch_bytes * tb > target_bytes:
        tb = max(1, target_bytes // per_batch_bytes)
        while B % tb:          # largest divisor of B within the budget
            tb -= 1
    nb = B // tb

    out = pl.pallas_call(
        _soft_pos_embed_kernel,
        out_shape=jax.ShapeDtypeStruct((B, C, HW), jnp.float32),
        grid_spec=pltpu.PrefetchScalarGridSpec(
            num_scalar_prefetch=0,
            grid=(nb,),
            in_specs=[
                pl.BlockSpec((tb, C, HW), lambda b: (b, 0, 0)),   # x batch tile
                pl.BlockSpec((_K_PAD, HW), lambda b: (0, 0)),     # grid (resident)
                pl.BlockSpec((C, _K_PAD), lambda b: (0, 0)),      # weight (resident)
                pl.BlockSpec((C, 1), lambda b: (0, 0)),           # bias (resident)
            ],
            out_specs=pl.BlockSpec((tb, C, HW), lambda b: (b, 0, 0)),
        ),
        # Read-modify-write of x: reuse its HBM buffer for the output.
        input_output_aliases={0: 0},
        compiler_params=pltpu.CompilerParams(
            dimension_semantics=("parallel",)),
    )(x, g_pad, w_pad, b_col)

    return out.reshape(B, C, H, W)


if __name__ == "__main__":
    hidden_size = 32
    resolution = (16, 16)
    batch = 2

    key = jax.random.PRNGKey(0)
    k_x, k_w, k_b = jax.random.split(key, 3)

    # Conv2d(4, hidden, 1) parameters: weight (hidden, 4, 1, 1) -> (hidden, 4), bias (hidden,)
    weight = jax.random.normal(k_w, (hidden_size, 4), dtype=jnp.float32) * 0.1
    bias = jax.random.normal(k_b, (hidden_size,), dtype=jnp.float32) * 0.1

    grid_chw = build_grid_chw(resolution)  # (4, H*W)

    # Example input, NCHW as in PyTorch.
    x = jax.random.normal(
        k_x, (batch, hidden_size, resolution[0], resolution[1]), dtype=jnp.float32)

    out = soft_position_embed(x, grid_chw, weight, bias)
    out = jax.block_until_ready(out)

    # Pure-JAX reference replicating the PyTorch forward (1x1 conv + broadcast add).
    emb_ref = (weight @ grid_chw + bias[:, None]).reshape(
        1, hidden_size, resolution[0], resolution[1])
    ref = x + emb_ref
    np.testing.assert_allclose(np.asarray(out), np.asarray(ref), rtol=1e-5, atol=1e-5)

    print("KERNEL_OK")
</pallas_src>

<mosaic_0001>
module attributes {stable_mosaic.version = 11 : i64} {
  func.func @_soft_pos_embed_kernel(%arg0: i32, %arg1: memref<2x32x256xf32, #tpu.memory_space<vmem>>, %arg2: memref<8x256xf32, #tpu.memory_space<vmem>>, %arg3: memref<32x8xf32, #tpu.memory_space<vmem>>, %arg4: memref<32x1xf32, #tpu.memory_space<vmem>>, %arg5: memref<2x32x256xf32, #tpu.memory_space<vmem>>) attributes {dimension_semantics = [#tpu.dimension_semantics<parallel>], iteration_bounds = array<i64: 1>, scalar_prefetch = 0 : i64, scratch_operands = 0 : i64, tpu.core_type = #tpu.core_type<tc>, window_params = [{transform_indices = @transform_0, window_bounds = array<i64: 2, 32, 256>}, {pipeline_mode = #tpu.pipeline_mode<synchronous>, transform_indices = @transform_1, window_bounds = array<i64: 8, 256>}, {pipeline_mode = #tpu.pipeline_mode<synchronous>, transform_indices = @transform_2, window_bounds = array<i64: 32, 8>}, {pipeline_mode = #tpu.pipeline_mode<synchronous>, transform_indices = @transform_3, window_bounds = array<i64: 32, 1>}, {transform_indices = @transform_4, window_bounds = array<i64: 2, 32, 256>}]} {
    %c0 = arith.constant 0 : index
    %c0_0 = arith.constant 0 : index
    %0 = vector.load %arg3[%c0, %c0_0] : memref<32x8xf32, #tpu.memory_space<vmem>>, vector<32x8xf32>
    %c0_1 = arith.constant 0 : index
    %c0_2 = arith.constant 0 : index
    %1 = vector.load %arg2[%c0_1, %c0_2] : memref<8x256xf32, #tpu.memory_space<vmem>>, vector<8x256xf32>
    %cst = arith.constant dense<0.000000e+00> : vector<32x256xf32>
    %2 = tpu.matmul %0, %1, %cst {dimension_numbers = #tpu.dot_dimension_numbers<[1], [0], [0], [1], [0, 0, 1, 1], [], []>} : vector<32x8xf32>, vector<8x256xf32>, vector<32x256xf32> -> vector<32x256xf32>
    %c0_3 = arith.constant 0 : index
    %c0_4 = arith.constant 0 : index
    %3 = vector.load %arg4[%c0_3, %c0_4] : memref<32x1xf32, #tpu.memory_space<vmem>>, vector<32x1xf32>
    %4 = vector.broadcast %3 : vector<32x1xf32> to vector<32x256xf32>
    %5 = arith.addf %2, %4 : vector<32x256xf32>
    %c0_5 = arith.constant 0 : index
    %c0_6 = arith.constant 0 : index
    %c0_7 = arith.constant 0 : index
    %6 = vector.load %arg1[%c0_5, %c0_6, %c0_7] : memref<2x32x256xf32, #tpu.memory_space<vmem>>, vector<2x32x256xf32>
    %7 = vector.shape_cast %5 : vector<32x256xf32> to vector<1x32x256xf32>
    %8 = vector.broadcast %7 : vector<1x32x256xf32> to vector<2x32x256xf32>
    %9 = arith.addf %6, %8 : vector<2x32x256xf32>
    %c0_8 = arith.constant 0 : index
    %c0_9 = arith.constant 0 : index
    %c0_10 = arith.constant 0 : index
    %10 = vector.load %arg5[%c0_8, %c0_9, %c0_10] : memref<2x32x256xf32, #tpu.memory_space<vmem>>, vector<2x32x256xf32>
    tpu.vector_store %arg5[%c0_8, %c0_9, %c0_10], %9 {strides = array<i32>} : memref<2x32x256xf32, #tpu.memory_space<vmem>>, vector<2x32x256xf32>,
    return
  }
  func.func @transform_0(%arg0: i32) -> (i32, i32, i32) {
    %c0_i32 = arith.constant 0 : i32
    %c0_i32_0 = arith.constant 0 : i32
    %c0_i32_1 = arith.constant 0 : i32
    return %arg0, %c0_i32, %c0_i32_0 : i32, i32, i32
  }
  func.func @transform_1(%arg0: i32) -> (i32, i32) {
    %c0_i32 = arith.constant 0 : i32
    %c0_i32_0 = arith.constant 0 : i32
    %c0_i32_1 = arith.constant 0 : i32
    return %c0_i32, %c0_i32_0 : i32, i32
  }
  func.func @transform_2(%arg0: i32) -> (i32, i32) {
    %c0_i32 = arith.constant 0 : i32
    %c0_i32_0 = arith.constant 0 : i32
    %c0_i32_1 = arith.constant 0 : i32
    return %c0_i32, %c0_i32_0 : i32, i32
  }
  func.func @transform_3(%arg0: i32) -> (i32, i32) {
    %c0_i32 = arith.constant 0 : i32
    %c0_i32_0 = arith.constant 0 : i32
    %c0_i32_1 = arith.constant 0 : i32
    return %c0_i32, %c0_i32_0 : i32, i32
  }
  func.func @transform_4(%arg0: i32) -> (i32, i32, i32) {
    %c0_i32 = arith.constant 0 : i32
    %c0_i32_0 = arith.constant 0 : i32
    %c0_i32_1 = arith.constant 0 : i32
    return %arg0, %c0_i32, %c0_i32_0 : i32, i32, i32
  }
}

</mosaic_0001>

<llo_original>
// kernel: soft_position_embed.1
$region0: #{soft_position_embed.1}
  #allocation0 [shape = 'u32[]', space=smem, size = 0x4, offset = 0x4, fixed_abs, tag = 'smem constant byte address 0x4 - core index']
  #allocation1 [shape = 'u32[72,128]{1,0:T(1,128)}', space=vmem, size = 0x9000, scoped, tag = 'internal scratch']
  %s0 = inlined_call_operand.vmem [shape: f32[2,32,256], index: 0, kind: input, shape index: {}, may-alias: {0,4}]
  %s1 = inlined_call_operand.vmem [shape: f32[8,256], index: 1, kind: input, shape index: {}]
  %s2 = inlined_call_operand.vmem [shape: f32[32,8], index: 2, kind: input, shape index: {}]
  %s3 = inlined_call_operand.vmem [shape: f32[32,1], index: 3, kind: input, shape index: {}]
  %s4 = inlined_call_operand.vmem [shape: f32[2,32,256], index: 4, kind: output, shape index: {}, may-alias: {0,4}]
  %s5 = sld [smem:[#allocation0]]
  $region26: #{soft_position_embed.1} parent=0
    _
  %s7 = ssub.s32 1, %s5
  %s8 = scalar_select 0, %s7, %s5
  // Predicated region
  $region2: #{soft_position_embed.1} parent=0 // pred_check
    _
  $region3: #{soft_position_embed.1} parent=0 // pred_check_branch
    %10 = sbr.rel (0) target = $region5
  $region4: #{soft_position_embed.1} parent=0 // pred_region
    _
  $region5: #{soft_position_embed.1} parent=0 // pred_fallthru
    _
  // Predicated region
  $region6: #{soft_position_embed.1} parent=0 // pred_check
    _
  $region7: #{soft_position_embed.1} parent=0 // pred_check_branch
    %12 = sbr.rel (0) target = $region9
  $region8: #{soft_position_embed.1} parent=0 // pred_region
    _
  $region9: #{soft_position_embed.1} parent=0 // pred_fallthru
    _
  // Predicated region
  $region10: #{soft_position_embed.1} parent=0 // pred_check
    _
  $region11: #{soft_position_embed.1} parent=0 // pred_check_branch
    %14 = sbr.rel (0) target = $region13
  $region12: #{soft_position_embed.1} parent=0 // pred_region
    _
  $region13: #{soft_position_embed.1} parent=0 // pred_fallthru
    _
  // Predicated region
  $region14: #{soft_position_embed.1} parent=0 // pred_check
    _
  $region15: #{soft_position_embed.1} parent=0 // pred_check_branch
    %16 = sbr.rel (0) target = $region17
  $region16: #{soft_position_embed.1} parent=0 // pred_region
    _
  $region17: #{soft_position_embed.1} parent=0 // pred_fallthru
    _
  %v17 = vld [vmem:[%s2] sm:$0xff]
  %v18 = vld [vmem:[%s2 + $0x8] sm:$0xff]
  %v19 = vld [vmem:[%s2 + $0x10] sm:$0xff]
  %v20 = vld [vmem:[%s2 + $0x18] sm:$0xff]
  %v21 = vld [vmem:[%s1] sm:$0xff]
  %v22 = vld [vmem:[%s1 + $0x8] sm:$0xff]
  %v23 = vld [vmem:[%s3] sm:$0xff]
  %v24 = vld [vmem:[%s3 + $0x8] sm:$0xff]
  %v25 = vld [vmem:[%s3 + $0x10] sm:$0xff]
  %v26 = vld [vmem:[%s3 + $0x18] sm:$0xff]
  %28 = vset.pattern.permute.xlu0 0
  %29 = vperm.xlu0 %28, %v23
  %v30 = vpop.permute.xlu0 %29
  %33 = vset.pattern.permute.xlu0 0
  %34 = vperm.xlu0 %33, %v24
  %v35 = vpop.permute.xlu0 %34
  %38 = vset.pattern.permute.xlu0 0
  %39 = vperm.xlu0 %38, %v25
  %v40 = vpop.permute.xlu0 %39
  %43 = vset.pattern.permute.xlu0 0
  %44 = vperm.xlu0 %43, %v26
  %v45 = vpop.permute.xlu0 %44
  %vm47 = vcmask 64512
  %v49 = vsel %vm47, %v17, 0
  %v52 = vsel %vm47, %v18, 0
  %v55 = vsel %vm47, %v19, 0
  %v58 = vsel %vm47, %v20, 0
  %60 = vmatpush.msra.mxu0 0.0
  %61 = vmatpush.msra.mxu0 0.0
  %62 = vmatpush.msra.mxu0 0.0
  %63 = vmatpush.msra.mxu0 0.0
  %64 = vmatpush.msra.mxu0 0.0
  %65 = vmatpush.msra.mxu0 0.0
  %66 = vmatpush.msra.mxu0 0.0
  %67 = vmatpush.msra.mxu0 0.0
  %68 = vmatpush.msra.mxu0 0.0
  %69 = vmatpush.msra.mxu0 0.0
  %70 = vmatpush.msra.mxu0 0.0
  %71 = vmatpush.msra.mxu0 0.0
  %72 = vmatpush.msra.mxu0 0.0
  %73 = vmatpush.msra.mxu0 0.0
  %74 = vmatpush.msra.mxu0 0.0
  %75 = vmatpush.msra.mxu0 %v21
  %76 = vmatmul.f32.gmra.mxu0 %v49
  %v77 = vpop.f32.mrf.mxu0
  %v78 = vadd.f32 %v30, %v77
  %79 = vmatmul.f32.gmra.mxu0 %v52
  %v80 = vpop.f32.mrf.mxu0
  %v81 = vadd.f32 %v35, %v80
  %82 = vmatmul.f32.gmra.mxu0 %v55
  %v83 = vpop.f32.mrf.mxu0
  %v84 = vadd.f32 %v40, %v83
  %85 = vmatmul.f32.gmra.mxu0 %v58
  %v86 = vpop.f32.mrf.mxu0
  %v87 = vadd.f32 %v45, %v86
  %88 = vdwg.mxu0
  %89 = vmatpush.msra.mxu0 0.0
  %90 = vmatpush.msra.mxu0 0.0
  %91 = vmatpush.msra.mxu0 0.0
  %92 = vmatpush.msra.mxu0 0.0
  %93 = vmatpush.msra.mxu0 0.0
  %94 = vmatpush.msra.mxu0 0.0
  %95 = vmatpush.msra.mxu0 0.0
  %96 = vmatpush.msra.mxu0 0.0
  %97 = vmatpush.msra.mxu0 0.0
  %98 = vmatpush.msra.mxu0 0.0
  %99 = vmatpush.msra.mxu0 0.0
  %100 = vmatpush.msra.mxu0 0.0
  %101 = vmatpush.msra.mxu0 0.0
  %102 = vmatpush.msra.mxu0 0.0
  %103 = vmatpush.msra.mxu0 0.0
  %104 = vmatpush.msra.mxu0 %v22
  %105 = vmatmul.f32.gmra.mxu0 %v49
  %v106 = vpop.f32.mrf.mxu0
  %v107 = vadd.f32 %v30, %v106
  %108 = vmatmul.f32.gmra.mxu0 %v52
  %v109 = vpop.f32.mrf.mxu0
  %v110 = vadd.f32 %v35, %v109
  %111 = vmatmul.f32.gmra.mxu0 %v55
  %v112 = vpop.f32.mrf.mxu0
  %v113 = vadd.f32 %v40, %v112
  %114 = vmatmul.f32.gmra.mxu0 %v58
  %v115 = vpop.f32.mrf.mxu0
  %v116 = vadd.f32 %v45, %v115
  %117 = vdwg.mxu0
  %v118 = vld [vmem:[%s0] sm:$0xff]
  %v119 = vld [vmem:[%s0 + $0x8] sm:$0xff]
  %v120 = vld [vmem:[%s0 + $0x10] sm:$0xff]
  %v121 = vld [vmem:[%s0 + $0x18] sm:$0xff]
  %v122 = vld [vmem:[%s0 + $0x20] sm:$0xff]
  %v123 = vld [vmem:[%s0 + $0x28] sm:$0xff]
  %v124 = vld [vmem:[%s0 + $0x30] sm:$0xff]
  %v125 = vld [vmem:[%s0 + $0x38] sm:$0xff]
  %v126 = vld [vmem:[%s0 + $0x40] sm:$0xff]
  %v127 = vld [vmem:[%s0 + $0x48] sm:$0xff]
  %v128 = vld [vmem:[%s0 + $0x50] sm:$0xff]
  %v129 = vld [vmem:[%s0 + $0x58] sm:$0xff]
  %v130 = vld [vmem:[%s0 + $0x60] sm:$0xff]
  %v131 = vld [vmem:[%s0 + $0x68] sm:$0xff]
  %v132 = vld [vmem:[%s0 + $0x70] sm:$0xff]
  %v133 = vld [vmem:[%s0 + $0x78] sm:$0xff]
  %v134 = vadd.f32 %v118, %v78
  %v135 = vadd.f32 %v119, %v107
  %v136 = vadd.f32 %v120, %v81
  %v137 = vadd.f32 %v121, %v110
  %v138 = vadd.f32 %v122, %v84
  %v139 = vadd.f32 %v123, %v113
  %v140 = vadd.f32 %v124, %v87
  %v141 = vadd.f32 %v125, %v116
  %v142 = vadd.f32 %v126, %v78
  %v143 = vadd.f32 %v127, %v107
  %v144 = vadd.f32 %v128, %v81
  %v145 = vadd.f32 %v129, %v110
  %v146 = vadd.f32 %v130, %v84
  %v147 = vadd.f32 %v131, %v113
  %v148 = vadd.f32 %v132, %v87
  %v149 = vadd.f32 %v133, %v116
  %150 = vst [vmem:[%s4] sm:$0xff] %v134
  %151 = vst [vmem:[%s4 + $0x8] sm:$0xff] %v135
  %152 = vst [vmem:[%s4 + $0x10] sm:$0xff] %v136
  %153 = vst [vmem:[%s4 + $0x18] sm:$0xff] %v137
  %154 = vst [vmem:[%s4 + $0x20] sm:$0xff] %v138
  %155 = vst [vmem:[%s4 + $0x28] sm:$0xff] %v139
  %156 = vst [vmem:[%s4 + $0x30] sm:$0xff] %v140
  %157 = vst [vmem:[%s4 + $0x38] sm:$0xff] %v141
  %158 = vst [vmem:[%s4 + $0x40] sm:$0xff] %v142
  %159 = vst [vmem:[%s4 + $0x48] sm:$0xff] %v143
  %160 = vst [vmem:[%s4 + $0x50] sm:$0xff] %v144
  %161 = vst [vmem:[%s4 + $0x58] sm:$0xff] %v145
  %162 = vst [vmem:[%s4 + $0x60] sm:$0xff] %v146
  %163 = vst [vmem:[%s4 + $0x68] sm:$0xff] %v147
  %164 = vst [vmem:[%s4 + $0x70] sm:$0xff] %v148
  %165 = vst [vmem:[%s4 + $0x78] sm:$0xff] %v149
  // Predicated region
  $region18: #{soft_position_embed.1} parent=0 // pred_check
    _
  $region19: #{soft_position_embed.1} parent=0 // pred_check_branch
    %167 = sbr.rel (0) target = $region21
  $region20: #{soft_position_embed.1} parent=0 // pred_region
    _
  $region21: #{soft_position_embed.1} parent=0 // pred_fallthru
    _
  // Predicated region
  $region22: #{soft_position_embed.1} parent=0 // pred_check
    _
  $region23: #{soft_position_embed.1} parent=0 // pred_check_branch
    %169 = sbr.rel (0) target = $region25
  $region24: #{soft_position_embed.1} parent=0 // pred_region
    _
  $region25: #{soft_position_embed.1} parent=0 // pred_fallthru
    _

</llo_original>
